<compile_context>
chip_gen: v6e
topology: v6e:2x2x1
jax: 0.10.0
libtpu: 0.0.40
codegen_flags: <defaults>
</compile_context>

<pallas_src>
import functools

import jax
import jax.numpy as jnp
from jax.experimental import pallas as pl
from jax.experimental.pallas import tpu as pltpu

LANES = 128
_WIDTH_CANDIDATES = (4096, 2048, 1024, 512, 256, 128)
_TARGET_BLOCK_BYTES = 2 << 20     # ~2 MiB per block (safe on v5e/v6e/v7x)
_MULTI_STEP_BYTES = 4 << 20       # above this, guarantee a multi-step grid (v7x megacore)
_MIN_PALLAS_BYTES = 256 << 10     # below this, plain fused XLA wins (launch overhead)
_RAGGED_MIN_WIDTH = 256           # accepted axis-split widths for ragged inputs
_RAGGED_MAX_WIDTH = 1 << 16


def _safe_log_kernel(x_ref, o_ref, *, eps):
    # Clamp + log in f32 regardless of storage dtype (free: kernel is
    # HBM-bound; VPU max and EUP log have large slack), cast back on store.
    x = x_ref[...].astype(jnp.float32)
    y = jnp.log(jnp.maximum(x, jnp.float32(eps)))
    o_ref[...] = y.astype(o_ref.dtype)


def _row_multiple(itemsize: int) -> int:
    # Sub-32-bit dtypes pack 2/4 rows per sublane; keep packed sublanes full.
    return 8 * max(1, 4 // itemsize)


def _pick_row_tile(rows: int, width_padded: int, itemsize: int) -> int:
    mult = _row_multiple(itemsize)
    row_bytes = width_padded * itemsize
    row_tile = max(mult, (_TARGET_BLOCK_BYTES // row_bytes) // mult * mult)
    if rows * row_bytes > _MULTI_STEP_BYTES:
        # Ensure >= ~4 grid steps so "parallel" can shard across both v7x TCs.
        row_tile = min(row_tile, max(mult, (rows // 4) // mult * mult))
    return min(row_tile, rows)


def _run_2d(x2d: jax.Array, eps: float) -> jax.Array:
    """Run the SafeLog kernel on a 2-D view.  Last dim may be a non-multiple
    of 128 (it is then the full array extent and Pallas masks ragged lanes)."""
    rows, width = x2d.shape
    itemsize = jnp.dtype(x2d.dtype).itemsize
    width_padded = pl.cdiv(width, LANES) * LANES      # VMEM lane footprint
    row_tile = _pick_row_tile(rows, width_padded, itemsize)
    grid = (pl.cdiv(rows, row_tile),)
    n = rows * width
    return pl.pallas_call(
        functools.partial(_safe_log_kernel, eps=eps),
        out_shape=jax.ShapeDtypeStruct((rows, width), x2d.dtype),
        grid_spec=pl.GridSpec(
            grid=grid,
            in_specs=[pl.BlockSpec((row_tile, width), lambda i: (i, 0))],
            out_specs=pl.BlockSpec((row_tile, width), lambda i: (i, 0)),
        ),
        compiler_params=pltpu.CompilerParams(
            dimension_semantics=("parallel",),
        ),
        cost_estimate=pl.CostEstimate(
            flops=n, transcendentals=n, bytes_accessed=2 * n * itemsize),
    )(x2d)


def safe_log(x: jax.Array, epsilon: float = 1e-6, *,
             min_pallas_bytes: int = _MIN_PALLAS_BYTES) -> jax.Array:
    """Elementwise log(max(x, eps)); preserves shape and dtype."""
    orig_shape = x.shape
    dtype = x.dtype
    n = x.size
    if n == 0:
        return x
    itemsize = jnp.dtype(dtype).itemsize

    # Tiny inputs: custom-call + pipeline ramp dominates; XLA fuses the two
    # elementwise ops into a single pass anyway.
    if n * itemsize < min_pallas_bytes:
        y = jnp.log(jnp.maximum(x.astype(jnp.float32), jnp.float32(epsilon)))
        return y.astype(dtype)

    flat = x.reshape(-1)  # free (row-major collapse)

    # Fast path: lane-dense slab, zero pad / zero extra HBM passes.
    width = next((w for w in _WIDTH_CANDIDATES if n % w == 0), None)
    if width is not None:
        out2d = _run_2d(flat.reshape(n // width, width), epsilon)
        return out2d.reshape(orig_shape)

    # Ragged path (n % 128 != 0): split at an axis boundary of the original
    # shape so both reshapes stay free; Pallas masks the ragged lanes.
    c = None
    prod = 1
    for d in reversed(orig_shape):
        prod *= d
        if _RAGGED_MIN_WIDTH <= prod <= _RAGGED_MAX_WIDTH:
            c = prod
            break
        if prod > _RAGGED_MAX_WIDTH:
            break
    if c is None and n <= _RAGGED_MAX_WIDTH:
        c = n  # small ragged input: single (1, n) full-extent block
    if c is not None:
        out2d = _run_2d(flat.reshape(n // c, c), epsilon)
        return out2d.reshape(orig_shape)

    # Pathological ragged shape (no axis split in [256, 65536] and n too large
    # for a single row): minimal pad to a lane multiple (<= 127 extra
    # elements), lane-dense slab, then slice.  Re-introduces two extra HBM
    # passes but only for shapes with no free axis split.
    # TODO(synk): replace with a manual-DMA (pl.ANY) ragged pipeline.
    n_pad = pl.cdiv(n, LANES) * LANES
    flat_p = jnp.pad(flat, (0, n_pad - n), constant_values=1)
    pad_width = next(w for w in _WIDTH_CANDIDATES if n_pad % w == 0)
    out2d = _run_2d(flat_p.reshape(n_pad // pad_width, pad_width), epsilon)
    return out2d.reshape(-1)[:n].reshape(orig_shape)


if __name__ == "__main__":
    key = jax.random.PRNGKey(0)
    eps = 1e-6
    k0, k1, k2, k3 = jax.random.split(key, 4)

    # 1) Primary NCHW input matching the PyTorch module usage (2, 4, 16, 16).
    #    Force the Pallas path (min_pallas_bytes=0) so the kernel itself runs.
    x = jax.random.normal(k0, (2, 4, 16, 16), dtype=jnp.float32)
    x = x.at[0, 0, 0, 0].set(0.0)          # would be log(0) without the clamp
    y = jax.block_until_ready(safe_log(x, eps, min_pallas_bytes=0))
    y_ref = jnp.log(jnp.maximum(x, eps))
    assert y.shape == x.shape and y.dtype == x.dtype
    assert jnp.allclose(y, y_ref, atol=1e-6, rtol=1e-6)

    # 2) Ragged element count (3*5*7*11 = 1155, not a multiple of 128):
    #    exercises the zero-copy ragged path (axis split -> (3, 385)).
    x2 = jax.random.normal(k1, (3, 5, 7, 11), dtype=jnp.float32)
    y2 = jax.block_until_ready(safe_log(x2, eps, min_pallas_bytes=0))
    y2_ref = jnp.log(jnp.maximum(x2, eps))
    assert y2.shape == x2.shape and y2.dtype == x2.dtype
    assert jnp.allclose(y2, y2_ref, atol=1e-6, rtol=1e-6)

    # 3) bf16 input: kernel clamps/logs in f32 and casts back on store.
    x3 = jax.random.normal(k2, (2, 4, 16, 16), dtype=jnp.bfloat16)
    y3 = jax.block_until_ready(safe_log(x3, eps, min_pallas_bytes=0))
    y3_ref = jnp.log(jnp.maximum(x3.astype(jnp.float32), eps)).astype(jnp.bfloat16)
    assert y3.dtype == jnp.bfloat16
    assert jnp.allclose(y3.astype(jnp.float32), y3_ref.astype(jnp.float32),
                        atol=1e-2, rtol=1e-2)

    # 4) Default threshold: tiny input takes the fused-XLA short-circuit; a
    #    512 KiB input takes the Pallas fast path with a multi-row slab.
    y4 = jax.block_until_ready(safe_log(x, eps))
    assert jnp.allclose(y4, y_ref, atol=1e-6, rtol=1e-6)
    x5 = jax.random.normal(k3, (2, 4, 128, 128), dtype=jnp.float32)
    y5 = jax.block_until_ready(safe_log(x5, eps))
    assert jnp.allclose(y5, jnp.log(jnp.maximum(x5, eps)), atol=1e-6, rtol=1e-6)

    print("KERNEL_OK")
</pallas_src>

<mosaic_0001>
module attributes {stable_mosaic.version = 11 : i64} {
  func.func @_safe_log_kernel(%arg0: i32, %arg1: memref<1x2048xf32, #tpu.memory_space<vmem>>, %arg2: memref<1x2048xf32, #tpu.memory_space<vmem>>) attributes {dimension_semantics = [#tpu.dimension_semantics<parallel>], iteration_bounds = array<i64: 1>, scalar_prefetch = 0 : i64, scratch_operands = 0 : i64, tpu.core_type = #tpu.core_type<tc>, window_params = [{transform_indices = @transform_0, window_bounds = array<i64: 1, 2048>}, {transform_indices = @transform_1, window_bounds = array<i64: 1, 2048>}]} {
    %c0 = arith.constant 0 : index
    %c0_0 = arith.constant 0 : index
    %0 = vector.load %arg1[%c0, %c0_0] : memref<1x2048xf32, #tpu.memory_space<vmem>>, vector<1x2048xf32>
    %cst = arith.constant 9.99999997E-7 : f32
    %1 = vector.broadcast %cst : f32 to vector<1x2048xf32>
    %2 = arith.maximumf %0, %1 : vector<1x2048xf32>
    %3 = math.log %2 : vector<1x2048xf32>
    %c0_1 = arith.constant 0 : index
    %c0_2 = arith.constant 0 : index
    %4 = vector.load %arg2[%c0_1, %c0_2] : memref<1x2048xf32, #tpu.memory_space<vmem>>, vector<1x2048xf32>
    tpu.vector_store %arg2[%c0_1, %c0_2], %3 {strides = array<i32>} : memref<1x2048xf32, #tpu.memory_space<vmem>>, vector<1x2048xf32>,
    return
  }
  func.func @transform_0(%arg0: i32) -> (i32, i32) {
    %c0_i32 = arith.constant 0 : i32
    %c0_i32_0 = arith.constant 0 : i32
    return %arg0, %c0_i32 : i32, i32
  }
  func.func @transform_1(%arg0: i32) -> (i32, i32) {
    %c0_i32 = arith.constant 0 : i32
    %c0_i32_0 = arith.constant 0 : i32
    return %arg0, %c0_i32 : i32, i32
  }
}

</mosaic_0001>

<llo_original>
// kernel: tpu_custom_call.1
$region0: #{tpu_custom_call.1}
  #allocation0 [shape = 'u32[]', space=smem, size = 0x4, offset = 0x4, fixed_abs, tag = 'smem constant byte address 0x4 - core index']
  #allocation1 [shape = 'u32[144,128]{1,0:T(1,128)}', space=vmem, size = 0x12000, scoped, tag = 'internal scratch']
  %s0 = inlined_call_operand.hbm [shape: f32[1,2048], index: 0, kind: input, shape index: {}]
  %s1 = inlined_call_operand.hbm [shape: f32[1,2048], index: 1, kind: output, shape index: {}]
  %s2 = sld [smem:[#allocation0]]
  $region18: #{tpu_custom_call.1} parent=0
    _
  %s4 = ssub.s32 1, %s2
  %s5 = scalar_select 0, %s4, %s2
  $region1: #{tpu_custom_call.1} parent=0
    #allocation2 [shape = 'u8[8192]{0}', space=vmem, size = 0x2000, scoped, tag = 'input window, operand 0, single buffered']
    #allocation3 [shape = 's32[1]{0}', space=sflag, size = 0x4, scoped, tag = 'scoped memory for tpu_custom_call.1']
    #allocation4 [shape = 's32[1]{0}', space=sflag, size = 0x4, scoped, tag = 'scoped memory for tpu_custom_call.1']
    #allocation5 [shape = 'u8[8192]{0}', space=vmem, size = 0x2000, scoped, tag = 'output window, operand 0, single buffered']
    %6 = vsyncpa [#allocation3], 0
    %7 = vsyncpa [#allocation4], 0
    // Predicated region
    $region2: #{tpu_custom_call.1} parent=1 // pred_check
      _
    $region3: #{tpu_custom_call.1} parent=1 // pred_check_branch
      %9 = sbr.rel (0) target = $region5
    $region4: #{tpu_custom_call.1} parent=1 // pred_region
      %s11 = ssub.s32 256, 256
      %12 = vsyncadd [#allocation3], %s11
      %s14 = sshll.u32 [#allocation2], 4
      %s15 = int_to_ptr.vmem [resolvable:$true] %s14
      %17 = dma.hbm_to_vmem [thread:$0]  %s0, 256, %s15, [#allocation3]
    $region5: #{tpu_custom_call.1} parent=1 // pred_fallthru
      _
    // Predicated region
    $region6: #{tpu_custom_call.1} parent=1 // pred_check
      _
    $region7: #{tpu_custom_call.1} parent=1 // pred_check_branch
      %19 = sbr.rel (0) target = $region9
    $region8: #{tpu_custom_call.1} parent=1 // pred_region
      %20 = dma.done [#allocation3], 256
    $region9: #{tpu_custom_call.1} parent=1 // pred_fallthru
      _
    %v21 = vld [vmem:[#allocation2] sm:$0xff]
    %v22 = vld [vmem:[#allocation2 + $0x8] sm:$0xff]
    %v23 = vmax.f32 %v21, 1e-06
    %v24 = vmax.f32 %v22, 1e-06
    %v25 = vlog2.pop %v23
    %v26 = vmul.f32 %v25, 0.6931472
    %v27 = vlog2.pop %v24
    %v28 = vmul.f32 %v27, 0.6931472
    %29 = vst [vmem:[#allocation5] sm:$0xff] %v26
    %30 = vst [vmem:[#allocation5 + $0x8] sm:$0xff] %v28
    // Predicated region
    $region10: #{tpu_custom_call.1} parent=1 // pred_check
      _
    $region11: #{tpu_custom_call.1} parent=1 // pred_check_branch
      %32 = sbr.rel (0) target = $region13
    $region12: #{tpu_custom_call.1} parent=1 // pred_region
      %s34 = ssub.s32 256, 256
      %35 = vsyncadd [#allocation4], %s34
      %s37 = sshll.u32 [#allocation5], 4
      %s38 = int_to_ptr.vmem [resolvable:$true] %s37
      %40 = dma.vmem_to_hbm [thread:$0]  %s38, 256, %s1, [#allocation4]
    $region13: #{tpu_custom_call.1} parent=1 // pred_fallthru
      _
    // Predicated region
    $region14: #{tpu_custom_call.1} parent=1 // pred_check
      _
    $region15: #{tpu_custom_call.1} parent=1 // pred_check_branch
      %42 = sbr.rel (0) target = $region17
    $region16: #{tpu_custom_call.1} parent=1 // pred_region
      %43 = dma.done [#allocation4], 256
    $region17: #{tpu_custom_call.1} parent=1 // pred_fallthru
      _
    %44 = vsyncpa [#allocation3], 1
    %45 = vsyncpa [#allocation4], 1

</llo_original>
